<compile_context>
chip_gen: v5e
topology: v5e:2x2
jax: 0.10.0
libtpu: 0.0.40
codegen_flags: <defaults>
</compile_context>

<pallas_src>
import functools

import jax
import jax.numpy as jnp
from jax import lax
from jax.experimental import pallas as pl
from jax.experimental.pallas import tpu as pltpu


def _round_up(a, m):
    return ((a + m - 1) // m) * m


# ---------------------------------------------------------------------------
# Stage 1: QKV projection, head-major, K pre-transposed, scale folded into Wq.
# ---------------------------------------------------------------------------
def _qkv_proj_kernel(x_ref, wq_ref, wkT_ref, wv_ref,
                     q_ref, kT_ref, v_ref, *, heads):
    x = x_ref[0]                                          # (t, DIM) bf16
    for h in range(heads):                                # static unroll, H small
        q_ref[0, h] = jnp.dot(
            x, wq_ref[h], preferred_element_type=jnp.float32).astype(q_ref.dtype)
        # K^T_h = Wk_h (d, DIM) . x^T  (contract DIM = last dim of both operands).
        # Computed once here so stage 2 never transposes K in its hot loop.
        kT_ref[0, h] = lax.dot_general(
            wkT_ref[h], x, (((1,), (1,)), ((), ())),
            preferred_element_type=jnp.float32).astype(kT_ref.dtype)
        v_ref[0, h] = jnp.dot(
            x, wv_ref[h], preferred_element_type=jnp.float32).astype(v_ref.dtype)


# ---------------------------------------------------------------------------
# Stage 2: attention.  K^T / V for the whole sequence of one head live in VMEM
# (index_map ignores the query-tile axis -> fetched once per (b, h)).
# ---------------------------------------------------------------------------
def _attn_kernel(q_ref, kT_ref, v_ref, o_ref, *, n_real, needs_mask):
    q = q_ref[0, 0]            # (t, d)      bf16, scale already folded in
    kT = kT_ref[0, 0]          # (d, N_pad)  bf16, resident across q tiles
    v = v_ref[0, 0]            # (N_pad, d)  bf16, resident across q tiles

    # scores: plain (t, d) @ (d, N_pad) -> (t, N_pad) f32 accumulation
    s = jnp.dot(q, kT, preferred_element_type=jnp.float32)

    if needs_mask:  # static: only traced when the sequence was padded
        key_idx = lax.broadcasted_iota(jnp.int32, s.shape, 1)
        # large finite negative instead of -inf (robust: exp never sees NaN)
        s = jnp.where(key_idx < n_real, s, -1e30)

    # full-row softmax in f32 (K/V fit VMEM, so scores fit too at ViT scales)
    # TODO(synk): for very long sequences switch to a chunked online softmax.
    m = jnp.max(s, axis=-1, keepdims=True)
    p = jnp.exp(s - m)
    l = jnp.sum(p, axis=-1, keepdims=True)
    o = jnp.dot(p.astype(jnp.bfloat16), v, preferred_element_type=jnp.float32)
    o_ref[0, 0] = (o * pl.reciprocal(l, approx=True)).astype(o_ref.dtype)


# ---------------------------------------------------------------------------
# Stage 3: output projection (concat heads -> dim) + bias.
# ---------------------------------------------------------------------------
def _out_proj_kernel(a_ref, w_ref, b_ref, o_ref, *, heads):
    acc = jnp.zeros(o_ref.shape[1:], jnp.float32)         # (t, DIM) f32
    for h in range(heads):                                 # static unroll
        acc = acc + jnp.dot(a_ref[0, h], w_ref[h],
                            preferred_element_type=jnp.float32)
    o_ref[0] = (acc + b_ref[...]).astype(o_ref.dtype)


# ---------------------------------------------------------------------------
# Wrapper
# ---------------------------------------------------------------------------
def attention_forward(x, w_qkv, w_out, b_out, *, heads, dim_head):
    """x: (B, N, DIM) float32.  w_qkv: (3*inner, dim), w_out: (dim, inner),
    b_out: (dim,) -- PyTorch nn.Linear layout."""
    B, N, DIM = x.shape
    d = dim_head
    scale = dim_head ** (-0.5)

    # Tile selection: single tile (= full padded seq) for typical ViT lengths,
    # otherwise 256-row tiles (keeps every block dim 128-divisible or full).
    n_pad8 = _round_up(N, 8)
    if n_pad8 <= 512:
        t, n_pad = n_pad8, n_pad8
    else:
        t = 256
        n_pad = _round_up(N, t)
    n_tiles = n_pad // t
    needs_mask = (n_pad != N)

    # ---- parameter prep (done once at model-load time in a real model) ----
    w3 = w_qkv.reshape(3, heads, d, DIM)
    wq = (jnp.transpose(w3[0], (0, 2, 1)) * scale).astype(jnp.bfloat16)   # (H, DIM, d), scale folded
    wkT = w3[1].astype(jnp.bfloat16)                                      # (H, d, DIM)  (already K^T form)
    wv = jnp.transpose(w3[2], (0, 2, 1)).astype(jnp.bfloat16)             # (H, DIM, d)
    wout = jnp.transpose(w_out).reshape(heads, d, DIM).astype(jnp.bfloat16)  # (H, d, DIM)
    bias2d = b_out.reshape(1, DIM).astype(jnp.float32)

    x_p = x
    if n_pad != N:
        x_p = jnp.pad(x, ((0, 0), (0, n_pad - N), (0, 0)))
    x_b = x_p.astype(jnp.bfloat16)

    # 48 MiB: leaves headroom on v7x (64 MiB physical/TC), plenty on v5e/v6e.
    vmem_cap = 48 * 1024 * 1024

    # ---- stage 1: QKV projection --------------------------------------------
    q_hm, kT_hm, v_hm = pl.pallas_call(
        functools.partial(_qkv_proj_kernel, heads=heads),
        out_shape=(
            jax.ShapeDtypeStruct((B, heads, n_pad, d), jnp.bfloat16),
            jax.ShapeDtypeStruct((B, heads, d, n_pad), jnp.bfloat16),
            jax.ShapeDtypeStruct((B, heads, n_pad, d), jnp.bfloat16),
        ),
        grid_spec=pltpu.PrefetchScalarGridSpec(
            num_scalar_prefetch=0,
            grid=(B, n_tiles),
            in_specs=[
                pl.BlockSpec((1, t, DIM), lambda b, i: (b, i, 0)),
                pl.BlockSpec((heads, DIM, d), lambda b, i: (0, 0, 0)),
                pl.BlockSpec((heads, d, DIM), lambda b, i: (0, 0, 0)),
                pl.BlockSpec((heads, DIM, d), lambda b, i: (0, 0, 0)),
            ],
            out_specs=[
                pl.BlockSpec((1, heads, t, d), lambda b, i: (b, 0, i, 0)),
                pl.BlockSpec((1, heads, d, t), lambda b, i: (b, 0, 0, i)),
                pl.BlockSpec((1, heads, t, d), lambda b, i: (b, 0, i, 0)),
            ]),
        compiler_params=pltpu.CompilerParams(
            dimension_semantics=("parallel", "parallel"),
            vmem_limit_bytes=vmem_cap),
        cost_estimate=pl.CostEstimate(
            flops=2 * B * n_pad * DIM * 3 * heads * d,
            transcendentals=0,
            bytes_accessed=2 * (B * n_pad * DIM + 3 * heads * DIM * d
                                + 3 * B * heads * n_pad * d)),
    )(x_b, wq, wkT, wv)

    # ---- stage 2: per-head attention ----------------------------------------
    attn = pl.pallas_call(
        functools.partial(_attn_kernel, n_real=N, needs_mask=needs_mask),
        out_shape=jax.ShapeDtypeStruct((B, heads, n_pad, d), jnp.bfloat16),
        grid_spec=pltpu.PrefetchScalarGridSpec(
            num_scalar_prefetch=0,
            grid=(B, heads, n_tiles),          # q-tile axis innermost
            in_specs=[
                pl.BlockSpec((1, 1, t, d), lambda b, h, qi: (b, h, qi, 0)),
                # full-sequence K^T / V of one head; index_map ignores qi ->
                # DMA'd once per (b, h), resident in VMEM across query tiles.
                pl.BlockSpec((1, 1, d, n_pad), lambda b, h, qi: (b, h, 0, 0)),
                pl.BlockSpec((1, 1, n_pad, d), lambda b, h, qi: (b, h, 0, 0)),
            ],
            out_specs=pl.BlockSpec((1, 1, t, d), lambda b, h, qi: (b, h, qi, 0))),
        compiler_params=pltpu.CompilerParams(
            # no cross-iteration accumulation -> every axis (incl. heads) is
            # parallel; guarantees 2-way TC sharding on v7x even at B=1.
            dimension_semantics=("parallel", "parallel", "parallel"),
            vmem_limit_bytes=vmem_cap),
        cost_estimate=pl.CostEstimate(
            flops=4 * B * heads * n_pad * n_pad * d,
            transcendentals=B * heads * n_pad * n_pad,
            # Q read + K^T/V read once per (b,h) + O write, all bf16
            bytes_accessed=2 * 4 * B * heads * n_pad * d),
    )(q_hm, kT_hm, v_hm)

    # ---- stage 3: output projection + bias ----------------------------------
    out = pl.pallas_call(
        functools.partial(_out_proj_kernel, heads=heads),
        out_shape=jax.ShapeDtypeStruct((B, n_pad, DIM), x.dtype),
        grid_spec=pltpu.PrefetchScalarGridSpec(
            num_scalar_prefetch=0,
            grid=(B, n_tiles),
            in_specs=[
                pl.BlockSpec((1, heads, t, d), lambda b, i: (b, 0, i, 0)),
                pl.BlockSpec((heads, d, DIM), lambda b, i: (0, 0, 0)),
                pl.BlockSpec((1, DIM), lambda b, i: (0, 0)),
            ],
            out_specs=pl.BlockSpec((1, t, DIM), lambda b, i: (b, i, 0))),
        compiler_params=pltpu.CompilerParams(
            dimension_semantics=("parallel", "parallel"),
            vmem_limit_bytes=vmem_cap),
        cost_estimate=pl.CostEstimate(
            flops=2 * B * n_pad * heads * d * DIM,
            transcendentals=0,
            bytes_accessed=2 * B * heads * n_pad * d + 2 * heads * d * DIM
                           + B * n_pad * DIM * x.dtype.itemsize),
    )(attn, wout, bias2d)

    if n_pad != N:
        out = out[:, :N, :]
    # TODO(synk): demo DIM=32 (<128) lowers to masked stores in stage 3; real
    # ViT DIM (768/1024) is already lane-dense.
    return out


def attention_reference(x, w_qkv, w_out, b_out, *, heads, dim_head):
    """Plain-JAX f32 reference mirroring the PyTorch forward."""
    B, N, DIM = x.shape
    inner = heads * dim_head
    scale = dim_head ** (-0.5)
    qkv = x @ w_qkv.T                                     # (B, N, 3*inner)
    q, k, v = jnp.split(qkv, 3, axis=-1)

    def to_heads(a):
        return a.reshape(B, N, heads, dim_head).transpose(0, 2, 1, 3)

    q, k, v = map(to_heads, (q, k, v))                    # (B, H, N, d)
    dots = jnp.einsum('bhid,bhjd->bhij', q, k) * scale
    attn = jax.nn.softmax(dots, axis=-1)
    out = jnp.einsum('bhij,bhjd->bhid', attn, v)
    out = out.transpose(0, 2, 1, 3).reshape(B, N, inner)
    return out @ w_out.T + b_out


if __name__ == "__main__":
    # Small shapes consistent with the module's forward: (b, n, dim)
    B, N, DIM = 2, 8, 32
    HEADS, DIM_HEAD = 4, 16
    INNER = HEADS * DIM_HEAD

    key = jax.random.PRNGKey(0)
    kx, kqkv, kwo, kbo = jax.random.split(key, 4)

    x = jax.random.normal(kx, (B, N, DIM), dtype=jnp.float32)
    # Deterministic parameter init (PyTorch nn.Linear layout: (out, in))
    w_qkv = jax.random.normal(kqkv, (3 * INNER, DIM), dtype=jnp.float32) * 0.05
    w_out = jax.random.normal(kwo, (DIM, INNER), dtype=jnp.float32) * 0.05
    b_out = jax.random.normal(kbo, (DIM,), dtype=jnp.float32) * 0.05

    y = attention_forward(x, w_qkv, w_out, b_out,
                          heads=HEADS, dim_head=DIM_HEAD)
    y = jax.block_until_ready(y)

    y_ref = attention_reference(x, w_qkv, w_out, b_out,
                                heads=HEADS, dim_head=DIM_HEAD)
    assert y.shape == (B, N, DIM)
    # bf16 MXU operands / bf16 intermediates with f32 accumulation.
    assert jnp.allclose(y, y_ref, atol=2e-2, rtol=2e-2), "mismatch vs reference"

    print("KERNEL_OK")
</pallas_src>

<mosaic_0001>
module attributes {stable_mosaic.version = 11 : i64} {
  func.func @_qkv_proj_kernel(%arg0: i32, %arg1: i32, %arg2: memref<1x8x32xbf16, #tpu.memory_space<vmem>>, %arg3: memref<4x32x16xbf16, #tpu.memory_space<vmem>>, %arg4: memref<4x16x32xbf16, #tpu.memory_space<vmem>>, %arg5: memref<4x32x16xbf16, #tpu.memory_space<vmem>>, %arg6: memref<1x4x8x16xbf16, #tpu.memory_space<vmem>>, %arg7: memref<1x4x16x8xbf16, #tpu.memory_space<vmem>>, %arg8: memref<1x4x8x16xbf16, #tpu.memory_space<vmem>>) attributes {dimension_semantics = [#tpu.dimension_semantics<parallel>, #tpu.dimension_semantics<parallel>], iteration_bounds = array<i64: 2, 1>, scalar_prefetch = 0 : i64, scratch_operands = 0 : i64, tpu.core_type = #tpu.core_type<tc>, window_params = [{transform_indices = @transform_0, window_bounds = array<i64: 1, 8, 32>}, {pipeline_mode = #tpu.pipeline_mode<synchronous>, transform_indices = @transform_1, window_bounds = array<i64: 4, 32, 16>}, {pipeline_mode = #tpu.pipeline_mode<synchronous>, transform_indices = @transform_2, window_bounds = array<i64: 4, 16, 32>}, {pipeline_mode = #tpu.pipeline_mode<synchronous>, transform_indices = @transform_3, window_bounds = array<i64: 4, 32, 16>}, {transform_indices = @transform_4, window_bounds = array<i64: 1, 4, 8, 16>}, {transform_indices = @transform_5, window_bounds = array<i64: 1, 4, 16, 8>}, {transform_indices = @transform_6, window_bounds = array<i64: 1, 4, 8, 16>}]} {
    %c0 = arith.constant 0 : index
    %c0_0 = arith.constant 0 : index
    %c0_1 = arith.constant 0 : index
    %0 = vector.load %arg2[%c0, %c0_0, %c0_1] : memref<1x8x32xbf16, #tpu.memory_space<vmem>>, vector<1x8x32xbf16>
    %1 = vector.shape_cast %0 : vector<1x8x32xbf16> to vector<8x32xbf16>
    %c0_2 = arith.constant 0 : index
    %c0_3 = arith.constant 0 : index
    %c0_4 = arith.constant 0 : index
    %2 = vector.load %arg3[%c0_2, %c0_3, %c0_4] : memref<4x32x16xbf16, #tpu.memory_space<vmem>>, vector<1x32x16xbf16>
    %3 = vector.shape_cast %2 : vector<1x32x16xbf16> to vector<32x16xbf16>
    %cst = arith.constant dense<0.000000e+00> : vector<8x16xf32>
    %4 = tpu.matmul %1, %3, %cst {dimension_numbers = #tpu.dot_dimension_numbers<[1], [0], [0], [1], [0, 0, 1, 1], [], []>} : vector<8x32xbf16>, vector<32x16xbf16>, vector<8x16xf32> -> vector<8x16xf32>
    %5 = arith.truncf %4 : vector<8x16xf32> to vector<8x16xbf16>
    %c0_5 = arith.constant 0 : index
    %c0_6 = arith.constant 0 : index
    %c0_7 = arith.constant 0 : index
    %c0_8 = arith.constant 0 : index
    %6 = vector.load %arg6[%c0_5, %c0_6, %c0_7, %c0_8] : memref<1x4x8x16xbf16, #tpu.memory_space<vmem>>, vector<1x1x8x16xbf16>
    %7 = vector.shape_cast %6 : vector<1x1x8x16xbf16> to vector<8x16xbf16>
    %8 = vector.shape_cast %5 : vector<8x16xbf16> to vector<1x1x8x16xbf16>
    tpu.vector_store %arg6[%c0_5, %c0_6, %c0_7, %c0_8], %8 {strides = array<i32>} : memref<1x4x8x16xbf16, #tpu.memory_space<vmem>>, vector<1x1x8x16xbf16>,
    %c0_9 = arith.constant 0 : index
    %c0_10 = arith.constant 0 : index
    %c0_11 = arith.constant 0 : index
    %9 = vector.load %arg4[%c0_9, %c0_10, %c0_11] : memref<4x16x32xbf16, #tpu.memory_space<vmem>>, vector<1x16x32xbf16>
    %10 = vector.shape_cast %9 : vector<1x16x32xbf16> to vector<16x32xbf16>
    %cst_12 = arith.constant dense<0.000000e+00> : vector<16x8xf32>
    %11 = tpu.matmul %10, %1, %cst_12 {dimension_numbers = #tpu.dot_dimension_numbers<[1], [1], [0], [0], [0, 0, 1, 0], [], []>} : vector<16x32xbf16>, vector<8x32xbf16>, vector<16x8xf32> -> vector<16x8xf32>
    %12 = arith.truncf %11 : vector<16x8xf32> to vector<16x8xbf16>
    %c0_13 = arith.constant 0 : index
    %c0_14 = arith.constant 0 : index
    %c0_15 = arith.constant 0 : index
    %c0_16 = arith.constant 0 : index
    %13 = vector.load %arg7[%c0_13, %c0_14, %c0_15, %c0_16] : memref<1x4x16x8xbf16, #tpu.memory_space<vmem>>, vector<1x1x16x8xbf16>
    %14 = vector.shape_cast %13 : vector<1x1x16x8xbf16> to vector<16x8xbf16>
    %15 = vector.shape_cast %12 : vector<16x8xbf16> to vector<1x1x16x8xbf16>
    tpu.vector_store %arg7[%c0_13, %c0_14, %c0_15, %c0_16], %15 {strides = array<i32>} : memref<1x4x16x8xbf16, #tpu.memory_space<vmem>>, vector<1x1x16x8xbf16>,
    %c0_17 = arith.constant 0 : index
    %c0_18 = arith.constant 0 : index
    %c0_19 = arith.constant 0 : index
    %16 = vector.load %arg5[%c0_17, %c0_18, %c0_19] : memref<4x32x16xbf16, #tpu.memory_space<vmem>>, vector<1x32x16xbf16>
    %17 = vector.shape_cast %16 : vector<1x32x16xbf16> to vector<32x16xbf16>
    %cst_20 = arith.constant dense<0.000000e+00> : vector<8x16xf32>
    %18 = tpu.matmul %1, %17, %cst_20 {dimension_numbers = #tpu.dot_dimension_numbers<[1], [0], [0], [1], [0, 0, 1, 1], [], []>} : vector<8x32xbf16>, vector<32x16xbf16>, vector<8x16xf32> -> vector<8x16xf32>
    %19 = arith.truncf %18 : vector<8x16xf32> to vector<8x16xbf16>
    %c0_21 = arith.constant 0 : index
    %c0_22 = arith.constant 0 : index
    %c0_23 = arith.constant 0 : index
    %c0_24 = arith.constant 0 : index
    %20 = vector.load %arg8[%c0_21, %c0_22, %c0_23, %c0_24] : memref<1x4x8x16xbf16, #tpu.memory_space<vmem>>, vector<1x1x8x16xbf16>
    %21 = vector.shape_cast %20 : vector<1x1x8x16xbf16> to vector<8x16xbf16>
    %22 = vector.shape_cast %19 : vector<8x16xbf16> to vector<1x1x8x16xbf16>
    tpu.vector_store %arg8[%c0_21, %c0_22, %c0_23, %c0_24], %22 {strides = array<i32>} : memref<1x4x8x16xbf16, #tpu.memory_space<vmem>>, vector<1x1x8x16xbf16>,
    %c1 = arith.constant 1 : index
    %c0_25 = arith.constant 0 : index
    %c0_26 = arith.constant 0 : index
    %23 = vector.load %arg3[%c1, %c0_25, %c0_26] : memref<4x32x16xbf16, #tpu.memory_space<vmem>>, vector<1x32x16xbf16>
    %24 = vector.shape_cast %23 : vector<1x32x16xbf16> to vector<32x16xbf16>
    %cst_27 = arith.constant dense<0.000000e+00> : vector<8x16xf32>
    %25 = tpu.matmul %1, %24, %cst_27 {dimension_numbers = #tpu.dot_dimension_numbers<[1], [0], [0], [1], [0, 0, 1, 1], [], []>} : vector<8x32xbf16>, vector<32x16xbf16>, vector<8x16xf32> -> vector<8x16xf32>
    %26 = arith.truncf %25 : vector<8x16xf32> to vector<8x16xbf16>
    %c0_28 = arith.constant 0 : index
    %c1_29 = arith.constant 1 : index
    %c0_30 = arith.constant 0 : index
    %c0_31 = arith.constant 0 : index
    %27 = vector.load %arg6[%c0_28, %c1_29, %c0_30, %c0_31] : memref<1x4x8x16xbf16, #tpu.memory_space<vmem>>, vector<1x1x8x16xbf16>
    %28 = vector.shape_cast %27 : vector<1x1x8x16xbf16> to vector<8x16xbf16>
    %29 = vector.shape_cast %26 : vector<8x16xbf16> to vector<1x1x8x16xbf16>
    tpu.vector_store %arg6[%c0_28, %c1_29, %c0_30, %c0_31], %29 {strides = array<i32>} : memref<1x4x8x16xbf16, #tpu.memory_space<vmem>>, vector<1x1x8x16xbf16>,
    %c1_32 = arith.constant 1 : index
    %c0_33 = arith.constant 0 : index
    %c0_34 = arith.constant 0 : index
    %30 = vector.load %arg4[%c1_32, %c0_33, %c0_34] : memref<4x16x32xbf16, #tpu.memory_space<vmem>>, vector<1x16x32xbf16>
    %31 = vector.shape_cast %30 : vector<1x16x32xbf16> to vector<16x32xbf16>
    %cst_35 = arith.constant dense<0.000000e+00> : vector<16x8xf32>
    %32 = tpu.matmul %31, %1, %cst_35 {dimension_numbers = #tpu.dot_dimension_numbers<[1], [1], [0], [0], [0, 0, 1, 0], [], []>} : vector<16x32xbf16>, vector<8x32xbf16>, vector<16x8xf32> -> vector<16x8xf32>
    %33 = arith.truncf %32 : vector<16x8xf32> to vector<16x8xbf16>
    %c0_36 = arith.constant 0 : index
    %c1_37 = arith.constant 1 : index
    %c0_38 = arith.constant 0 : index
    %c0_39 = arith.constant 0 : index
    %34 = vector.load %arg7[%c0_36, %c1_37, %c0_38, %c0_39] : memref<1x4x16x8xbf16, #tpu.memory_space<vmem>>, vector<1x1x16x8xbf16>
    %35 = vector.shape_cast %34 : vector<1x1x16x8xbf16> to vector<16x8xbf16>
    %36 = vector.shape_cast %33 : vector<16x8xbf16> to vector<1x1x16x8xbf16>
    tpu.vector_store %arg7[%c0_36, %c1_37, %c0_38, %c0_39], %36 {strides = array<i32>} : memref<1x4x16x8xbf16, #tpu.memory_space<vmem>>, vector<1x1x16x8xbf16>,
    %c1_40 = arith.constant 1 : index
    %c0_41 = arith.constant 0 : index
    %c0_42 = arith.constant 0 : index
    %37 = vector.load %arg5[%c1_40, %c0_41, %c0_42] : memref<4x32x16xbf16, #tpu.memory_space<vmem>>, vector<1x32x16xbf16>
    %38 = vector.shape_cast %37 : vector<1x32x16xbf16> to vector<32x16xbf16>
    %cst_43 = arith.constant dense<0.000000e+00> : vector<8x16xf32>
    %39 = tpu.matmul %1, %38, %cst_43 {dimension_numbers = #tpu.dot_dimension_numbers<[1], [0], [0], [1], [0, 0, 1, 1], [], []>} : vector<8x32xbf16>, vector<32x16xbf16>, vector<8x16xf32> -> vector<8x16xf32>
    %40 = arith.truncf %39 : vector<8x16xf32> to vector<8x16xbf16>
    %c0_44 = arith.constant 0 : index
    %c1_45 = arith.constant 1 : index
    %c0_46 = arith.constant 0 : index
    %c0_47 = arith.constant 0 : index
    %41 = vector.load %arg8[%c0_44, %c1_45, %c0_46, %c0_47] : memref<1x4x8x16xbf16, #tpu.memory_space<vmem>>, vector<1x1x8x16xbf16>
    %42 = vector.shape_cast %41 : vector<1x1x8x16xbf16> to vector<8x16xbf16>
    %43 = vector.shape_cast %40 : vector<8x16xbf16> to vector<1x1x8x16xbf16>
    tpu.vector_store %arg8[%c0_44, %c1_45, %c0_46, %c0_47], %43 {strides = array<i32>} : memref<1x4x8x16xbf16, #tpu.memory_space<vmem>>, vector<1x1x8x16xbf16>,
    %c2 = arith.constant 2 : index
    %c0_48 = arith.constant 0 : index
    %c0_49 = arith.constant 0 : index
    %44 = vector.load %arg3[%c2, %c0_48, %c0_49] : memref<4x32x16xbf16, #tpu.memory_space<vmem>>, vector<1x32x16xbf16>
    %45 = vector.shape_cast %44 : vector<1x32x16xbf16> to vector<32x16xbf16>
    %cst_50 = arith.constant dense<0.000000e+00> : vector<8x16xf32>
    %46 = tpu.matmul %1, %45, %cst_50 {dimension_numbers = #tpu.dot_dimension_numbers<[1], [0], [0], [1], [0, 0, 1, 1], [], []>} : vector<8x32xbf16>, vector<32x16xbf16>, vector<8x16xf32> -> vector<8x16xf32>
    %47 = arith.truncf %46 : vector<8x16xf32> to vector<8x16xbf16>
    %c0_51 = arith.constant 0 : index
    %c2_52 = arith.constant 2 : index
    %c0_53 = arith.constant 0 : index
    %c0_54 = arith.constant 0 : index
    %48 = vector.load %arg6[%c0_51, %c2_52, %c0_53, %c0_54] : memref<1x4x8x16xbf16, #tpu.memory_space<vmem>>, vector<1x1x8x16xbf16>
    %49 = vector.shape_cast %48 : vector<1x1x8x16xbf16> to vector<8x16xbf16>
    %50 = vector.shape_cast %47 : vector<8x16xbf16> to vector<1x1x8x16xbf16>
    tpu.vector_store %arg6[%c0_51, %c2_52, %c0_53, %c0_54], %50 {strides = array<i32>} : memref<1x4x8x16xbf16, #tpu.memory_space<vmem>>, vector<1x1x8x16xbf16>,
    %c2_55 = arith.constant 2 : index
    %c0_56 = arith.constant 0 : index
    %c0_57 = arith.constant 0 : index
    %51 = vector.load %arg4[%c2_55, %c0_56, %c0_57] : memref<4x16x32xbf16, #tpu.memory_space<vmem>>, vector<1x16x32xbf16>
    %52 = vector.shape_cast %51 : vector<1x16x32xbf16> to vector<16x32xbf16>
    %cst_58 = arith.constant dense<0.000000e+00> : vector<16x8xf32>
    %53 = tpu.matmul %52, %1, %cst_58 {dimension_numbers = #tpu.dot_dimension_numbers<[1], [1], [0], [0], [0, 0, 1, 0], [], []>} : vector<16x32xbf16>, vector<8x32xbf16>, vector<16x8xf32> -> vector<16x8xf32>
    %54 = arith.truncf %53 : vector<16x8xf32> to vector<16x8xbf16>
    %c0_59 = arith.constant 0 : index
    %c2_60 = arith.constant 2 : index
    %c0_61 = arith.constant 0 : index
    %c0_62 = arith.constant 0 : index
    %55 = vector.load %arg7[%c0_59, %c2_60, %c0_61, %c0_62] : memref<1x4x16x8xbf16, #tpu.memory_space<vmem>>, vector<1x1x16x8xbf16>
    %56 = vector.shape_cast %55 : vector<1x1x16x8xbf16> to vector<16x8xbf16>
    %57 = vector.shape_cast %54 : vector<16x8xbf16> to vector<1x1x16x8xbf16>
    tpu.vector_store %arg7[%c0_59, %c2_60, %c0_61, %c0_62], %57 {strides = array<i32>} : memref<1x4x16x8xbf16, #tpu.memory_space<vmem>>, vector<1x1x16x8xbf16>,
    %c2_63 = arith.constant 2 : index
    %c0_64 = arith.constant 0 : index
    %c0_65 = arith.constant 0 : index
    %58 = vector.load %arg5[%c2_63, %c0_64, %c0_65] : memref<4x32x16xbf16, #tpu.memory_space<vmem>>, vector<1x32x16xbf16>
    %59 = vector.shape_cast %58 : vector<1x32x16xbf16> to vector<32x16xbf16>
    %cst_66 = arith.constant dense<0.000000e+00> : vector<8x16xf32>
    %60 = tpu.matmul %1, %59, %cst_66 {dimension_numbers = #tpu.dot_dimension_numbers<[1], [0], [0], [1], [0, 0, 1, 1], [], []>} : vector<8x32xbf16>, vector<32x16xbf16>, vector<8x16xf32> -> vector<8x16xf32>
    %61 = arith.truncf %60 : vector<8x16xf32> to vector<8x16xbf16>
    %c0_67 = arith.constant 0 : index
    %c2_68 = arith.constant 2 : index
    %c0_69 = arith.constant 0 : index
    %c0_70 = arith.constant 0 : index
    %62 = vector.load %arg8[%c0_67, %c2_68, %c0_69, %c0_70] : memref<1x4x8x16xbf16, #tpu.memory_space<vmem>>, vector<1x1x8x16xbf16>
    %63 = vector.shape_cast %62 : vector<1x1x8x16xbf16> to vector<8x16xbf16>
    %64 = vector.shape_cast %61 : vector<8x16xbf16> to vector<1x1x8x16xbf16>
    tpu.vector_store %arg8[%c0_67, %c2_68, %c0_69, %c0_70], %64 {strides = array<i32>} : memref<1x4x8x16xbf16, #tpu.memory_space<vmem>>, vector<1x1x8x16xbf16>,
    %c3 = arith.constant 3 : index
    %c0_71 = arith.constant 0 : index
    %c0_72 = arith.constant 0 : index
    %65 = vector.load %arg3[%c3, %c0_71, %c0_72] : memref<4x32x16xbf16, #tpu.memory_space<vmem>>, vector<1x32x16xbf16>
    %66 = vector.shape_cast %65 : vector<1x32x16xbf16> to vector<32x16xbf16>
    %cst_73 = arith.constant dense<0.000000e+00> : vector<8x16xf32>
    %67 = tpu.matmul %1, %66, %cst_73 {dimension_numbers = #tpu.dot_dimension_numbers<[1], [0], [0], [1], [0, 0, 1, 1], [], []>} : vector<8x32xbf16>, vector<32x16xbf16>, vector<8x16xf32> -> vector<8x16xf32>
    %68 = arith.truncf %67 : vector<8x16xf32> to vector<8x16xbf16>
    %c0_74 = arith.constant 0 : index
    %c3_75 = arith.constant 3 : index
    %c0_76 = arith.constant 0 : index
    %c0_77 = arith.constant 0 : index
    %69 = vector.load %arg6[%c0_74, %c3_75, %c0_76, %c0_77] : memref<1x4x8x16xbf16, #tpu.memory_space<vmem>>, vector<1x1x8x16xbf16>
    %70 = vector.shape_cast %69 : vector<1x1x8x16xbf16> to vector<8x16xbf16>
    %71 = vector.shape_cast %68 : vector<8x16xbf16> to vector<1x1x8x16xbf16>
    tpu.vector_store %arg6[%c0_74, %c3_75, %c0_76, %c0_77], %71 {strides = array<i32>} : memref<1x4x8x16xbf16, #tpu.memory_space<vmem>>, vector<1x1x8x16xbf16>,
    %c3_78 = arith.constant 3 : index
    %c0_79 = arith.constant 0 : index
    %c0_80 = arith.constant 0 : index
    %72 = vector.load %arg4[%c3_78, %c0_79, %c0_80] : memref<4x16x32xbf16, #tpu.memory_space<vmem>>, vector<1x16x32xbf16>
    %73 = vector.shape_cast %72 : vector<1x16x32xbf16> to vector<16x32xbf16>
    %cst_81 = arith.constant dense<0.000000e+00> : vector<16x8xf32>
    %74 = tpu.matmul %73, %1, %cst_81 {dimension_numbers = #tpu.dot_dimension_numbers<[1], [1], [0], [0], [0, 0, 1, 0], [], []>} : vector<16x32xbf16>, vector<8x32xbf16>, vector<16x8xf32> -> vector<16x8xf32>
    %75 = arith.truncf %74 : vector<16x8xf32> to vector<16x8xbf16>
    %c0_82 = arith.constant 0 : index
    %c3_83 = arith.constant 3 : index
    %c0_84 = arith.constant 0 : index
    %c0_85 = arith.constant 0 : index
    %76 = vector.load %arg7[%c0_82, %c3_83, %c0_84, %c0_85] : memref<1x4x16x8xbf16, #tpu.memory_space<vmem>>, vector<1x1x16x8xbf16>
    %77 = vector.shape_cast %76 : vector<1x1x16x8xbf16> to vector<16x8xbf16>
    %78 = vector.shape_cast %75 : vector<16x8xbf16> to vector<1x1x16x8xbf16>
    tpu.vector_store %arg7[%c0_82, %c3_83, %c0_84, %c0_85], %78 {strides = array<i32>} : memref<1x4x16x8xbf16, #tpu.memory_space<vmem>>, vector<1x1x16x8xbf16>,
    %c3_86 = arith.constant 3 : index
    %c0_87 = arith.constant 0 : index
    %c0_88 = arith.constant 0 : index
    %79 = vector.load %arg5[%c3_86, %c0_87, %c0_88] : memref<4x32x16xbf16, #tpu.memory_space<vmem>>, vector<1x32x16xbf16>
    %80 = vector.shape_cast %79 : vector<1x32x16xbf16> to vector<32x16xbf16>
    %cst_89 = arith.constant dense<0.000000e+00> : vector<8x16xf32>
    %81 = tpu.matmul %1, %80, %cst_89 {dimension_numbers = #tpu.dot_dimension_numbers<[1], [0], [0], [1], [0, 0, 1, 1], [], []>} : vector<8x32xbf16>, vector<32x16xbf16>, vector<8x16xf32> -> vector<8x16xf32>
    %82 = arith.truncf %81 : vector<8x16xf32> to vector<8x16xbf16>
    %c0_90 = arith.constant 0 : index
    %c3_91 = arith.constant 3 : index
    %c0_92 = arith.constant 0 : index
    %c0_93 = arith.constant 0 : index
    %83 = vector.load %arg8[%c0_90, %c3_91, %c0_92, %c0_93] : memref<1x4x8x16xbf16, #tpu.memory_space<vmem>>, vector<1x1x8x16xbf16>
    %84 = vector.shape_cast %83 : vector<1x1x8x16xbf16> to vector<8x16xbf16>
    %85 = vector.shape_cast %82 : vector<8x16xbf16> to vector<1x1x8x16xbf16>
    tpu.vector_store %arg8[%c0_90, %c3_91, %c0_92, %c0_93], %85 {strides = array<i32>} : memref<1x4x8x16xbf16, #tpu.memory_space<vmem>>, vector<1x1x8x16xbf16>,
    return
  }
  func.func @transform_0(%arg0: i32, %arg1: i32) -> (i32, i32, i32) {
    %c0_i32 = arith.constant 0 : i32
    %c0_i32_0 = arith.constant 0 : i32
    return %arg0, %arg1, %c0_i32 : i32, i32, i32
  }
  func.func @transform_1(%arg0: i32, %arg1: i32) -> (i32, i32, i32) {
    %c0_i32 = arith.constant 0 : i32
    %c0_i32_0 = arith.constant 0 : i32
    %c0_i32_1 = arith.constant 0 : i32
    %c0_i32_2 = arith.constant 0 : i32
    return %c0_i32, %c0_i32_0, %c0_i32_1 : i32, i32, i32
  }
  func.func @transform_2(%arg0: i32, %arg1: i32) -> (i32, i32, i32) {
    %c0_i32 = arith.constant 0 : i32
    %c0_i32_0 = arith.constant 0 : i32
    %c0_i32_1 = arith.constant 0 : i32
    %c0_i32_2 = arith.constant 0 : i32
    return %c0_i32, %c0_i32_0, %c0_i32_1 : i32, i32, i32
  }
  func.func @transform_3(%arg0: i32, %arg1: i32) -> (i32, i32, i32) {
    %c0_i32 = arith.constant 0 : i32
    %c0_i32_0 = arith.constant 0 : i32
    %c0_i32_1 = arith.constant 0 : i32
    %c0_i32_2 = arith.constant 0 : i32
    return %c0_i32, %c0_i32_0, %c0_i32_1 : i32, i32, i32
  }
  func.func @transform_4(%arg0: i32, %arg1: i32) -> (i32, i32, i32, i32) {
    %c0_i32 = arith.constant 0 : i32
    %c0_i32_0 = arith.constant 0 : i32
    %c0_i32_1 = arith.constant 0 : i32
    return %arg0, %c0_i32, %arg1, %c0_i32_0 : i32, i32, i32, i32
  }
  func.func @transform_5(%arg0: i32, %arg1: i32) -> (i32, i32, i32, i32) {
    %c0_i32 = arith.constant 0 : i32
    %c0_i32_0 = arith.constant 0 : i32
    %c0_i32_1 = arith.constant 0 : i32
    return %arg0, %c0_i32, %c0_i32_0, %arg1 : i32, i32, i32, i32
  }
  func.func @transform_6(%arg0: i32, %arg1: i32) -> (i32, i32, i32, i32) {
    %c0_i32 = arith.constant 0 : i32
    %c0_i32_0 = arith.constant 0 : i32
    %c0_i32_1 = arith.constant 0 : i32
    return %arg0, %c0_i32, %arg1, %c0_i32_0 : i32, i32, i32, i32
  }
}

</mosaic_0001>

<llo_original>
// kernel: tpu_custom_call.1
$region0: #{tpu_custom_call.1}
  #allocation0 [shape = 'u32[]', space=smem, size = 0x4, offset = 0x4, fixed_abs, tag = 'smem constant byte address 0x4 - core index']
  #allocation1 [shape = 'u32[72,128]{1,0:T(1,128)}', space=vmem, size = 0x9000, scoped, tag = 'internal scratch']
  %s0 = inlined_call_operand.vmem [shape: bf16[2,8,32], index: 0, kind: input, shape index: {}]
  %s1 = inlined_call_operand.vmem [shape: bf16[4,32,16], index: 1, kind: input, shape index: {}]
  %s2 = inlined_call_operand.vmem [shape: bf16[4,16,32], index: 2, kind: input, shape index: {}]
  %s3 = inlined_call_operand.vmem [shape: bf16[4,32,16], index: 3, kind: input, shape index: {}]
  %s4 = inlined_call_operand.hbm [shape: bf16[2,4,8,16], index: 4, kind: output, shape index: {0}]
  %s5 = inlined_call_operand.vmem [shape: bf16[2,4,16,8], index: 5, kind: output, shape index: {1}]
  %s6 = inlined_call_operand.hbm [shape: bf16[2,4,8,16], index: 6, kind: output, shape index: {2}]
  %7 = xla_tuple %s4, %s5, %s6
  %s8 = sld [smem:[#allocation0]]
  $region65: #{tpu_custom_call.1} parent=0
    _
  %s10 = ssub.s32 1, %s8
  %s11 = scalar_select 0, %s10, %s8
  $region1: #{tpu_custom_call.1} parent=0
    #allocation2 [shape = 'u8[16384]{0}', space=vmem, size = 0x4000, scoped, tag = 'output window, operand 0']
    #allocation3 [shape = 's32[2]{0}', space=sflag, size = 0x8, scoped, tag = 'scoped memory for tpu_custom_call.1']
    #allocation4 [shape = 'u8[16384]{0}', space=vmem, size = 0x4000, scoped, tag = 'output window, operand 2']
    #allocation5 [shape = 's32[2]{0}', space=sflag, size = 0x8, scoped, tag = 'scoped memory for tpu_custom_call.1']
    %12 = vsyncpa [#allocation3], 0
    %s13 = scalar_lea.sflag [#allocation3], 1
    %14 = vsyncpa %s13, 0
    %15 = vsyncpa [#allocation5], 0
    %s16 = scalar_lea.sflag [#allocation5], 1
    %17 = vsyncpa %s16, 0
    loop: start=0, step=1, limit=4
    $region2: #{tpu_custom_call.1} parent=1 // loop_pre_header
      _
    $region3: #{tpu_custom_call.1} parent=1 // loop_header
      %s19 = sphi 0, %s23
      %p20 = scmp.ge.s32.totalorder %s19, 4
      %s26 = sphi 0, %s38
      %s27 = sphi 0, %s34
      %s28 = sphi 0, %s26
      %s29 = sphi 0, %s27
      %s30 = sphi 0, %s28
      %s31 = sphi 0, %s29
      %s43 = sphi 0, %s45
      %s46 = sphi 0, %s43
      %s47 = sphi 0, %s46
      %s63 = sphi 0, %s47
      %s67 = sphi 0, %s67
      %s69 = sphi 0, %s67
      %s70 = sphi 0, %s69
      %s84 = sphi 0, %s70
      %s88 = sphi 0, %s88
      %s90 = sphi 0, %s88
      %s91 = sphi 0, %s90
      %s105 = sphi 0, %s91
      %s109 = sphi 0, %s109
      %s111 = sphi 0, %s109
      %s112 = sphi 0, %s111
      %s126 = sphi 0, %s112
      %s134 = sphi 0, %s136
      %s137 = sphi 0, %s134
      %s138 = sphi 0, %s137
      %s154 = sphi 0, %s138
      %s162 = sphi 0, %s164
      %s165 = sphi 0, %s162
      %s166 = sphi 0, %s165
      %s182 = sphi 0, %s166
      %s190 = sphi 0, %s192
      %s193 = sphi 0, %s190
      %s194 = sphi 0, %s193
      %s210 = sphi 0, %s194
    $region4: #{tpu_custom_call.1} parent=1 // loop_header_branch
      %22 = sbr.rel (%p20) target = $region8
    $region5: #{tpu_custom_call.1} parent=1 // loop_body
      %s24 = ssub.s32 %s19, 1
      %s25 = ssub.s32 %s19, 2
      %s32 = sadd.s32 1, %s27
      %p33 = scmp.ge.s32.totalorder %s32, 1
      %s34 = scalar_select %p33, 0, %s32
      %s35 = sadd.s32 1, %s26
      %s36 = scalar_select %p33, %s35, %s26
      %p37 = scmp.ge.s32.totalorder %s36, 2
      %s38 = scalar_select %p37, 0, %s36
      %s39 = ssub.s32 %s26, %s38
      %s40 = ssub.s32 %s27, %s34
      %s41 = sor.u32 %s39, %s40
      %p42 = scmp.eq.s32.totalorder %s41, 0
      %s44 = sadd.s32 %s43, 1
      %s45 = scalar_select %p42, %s43, %s44
      %p48 = pneg %p42
      %p49 = scmp.eq.s32.totalorder %s19, 1
      %p50 = por %p48, %p49
      %p51 = scmp.ne.s32.totalorder %s43, %s46
      %p52 = scmp.eq.s32.totalorder %s19, 0
      %p53 = por %p51, %p52
      %p54 = scmp.ne.s32.totalorder %s43, %s46
      %p55 = scmp.eq.s32.totalorder %s24, 1
      %p56 = por %p54, %p55
      %p57 = scmp.ne.s32.totalorder %s46, %s47
      %p58 = scmp.eq.s32.totalorder %s24, 0
      %p59 = por %p57, %p58
      %p60 = scmp.ne.s32.totalorder %s46, %s47
      %p61 = scmp.eq.s32.totalorder %s25, 1
      %p62 = por %p60, %p61
      %p64 = scmp.ne.s32.totalorder %s47, %s63
      %p65 = scmp.eq.s32.totalorder %s25, 0
      %p66 = por %p64, %p65
      %s68 = sadd.s32 %s67, 1
      %p71 = scmp.eq.s32.totalorder %s19, 1
      %p72 = scmp.ne.s32.totalorder %s67, %s69
      %p73 = scmp.eq.s32.totalorder %s19, 0
      %p74 = por %p72, %p73
      %p75 = scmp.ne.s32.totalorder %s67, %s69
      %p76 = scmp.eq.s32.totalorder %s24, 1
      %p77 = por %p75, %p76
      %p78 = scmp.ne.s32.totalorder %s69, %s70
      %p79 = scmp.eq.s32.totalorder %s24, 0
      %p80 = por %p78, %p79
      %p81 = scmp.ne.s32.totalorder %s69, %s70
      %p82 = scmp.eq.s32.totalorder %s25, 1
      %p83 = por %p81, %p82
      %p85 = scmp.ne.s32.totalorder %s70, %s84
      %p86 = scmp.eq.s32.totalorder %s25, 0
      %p87 = por %p85, %p86
      %s89 = sadd.s32 %s88, 1
      %p92 = scmp.eq.s32.totalorder %s19, 1
      %p93 = scmp.ne.s32.totalorder %s88, %s90
      %p94 = scmp.eq.s32.totalorder %s19, 0
      %p95 = por %p93, %p94
      %p96 = scmp.ne.s32.totalorder %s88, %s90
      %p97 = scmp.eq.s32.totalorder %s24, 1
      %p98 = por %p96, %p97
      %p99 = scmp.ne.s32.totalorder %s90, %s91
      %p100 = scmp.eq.s32.totalorder %s24, 0
      %p101 = por %p99, %p100
      %p102 = scmp.ne.s32.totalorder %s90, %s91
      %p103 = scmp.eq.s32.totalorder %s25, 1
      %p104 = por %p102, %p103
      %p106 = scmp.ne.s32.totalorder %s91, %s105
      %p107 = scmp.eq.s32.totalorder %s25, 0
      %p108 = por %p106, %p107
      %s110 = sadd.s32 %s109, 1
      %p113 = scmp.eq.s32.totalorder %s19, 1
      %p114 = scmp.ne.s32.totalorder %s109, %s111
      %p115 = scmp.eq.s32.totalorder %s19, 0
      %p116 = por %p114, %p115
      %p117 = scmp.ne.s32.totalorder %s109, %s111
      %p118 = scmp.eq.s32.totalorder %s24, 1
      %p119 = por %p117, %p118
      %p120 = scmp.ne.s32.totalorder %s111, %s112
      %p121 = scmp.eq.s32.totalorder %s24, 0
      %p122 = por %p120, %p121
      %p123 = scmp.ne.s32.totalorder %s111, %s112
      %p124 = scmp.eq.s32.totalorder %s25, 1
      %p125 = por %p123, %p124
      %p127 = scmp.ne.s32.totalorder %s112, %s126
      %p128 = scmp.eq.s32.totalorder %s25, 0
      %p129 = por %p127, %p128
      %s130 = ssub.s32 %s26, %s38
      %s131 = ssub.s32 %s27, %s34
      %s132 = sor.u32 %s130, %s131
      %p133 = scmp.eq.s32.totalorder %s132, 0
      %s135 = sadd.s32 %s134, 1
      %s136 = scalar_select %p133, %s134, %s135
      %p139 = pneg %p133
      %p140 = scmp.eq.s32.totalorder %s19, 1
      %p141 = por %p139, %p140
      %p142 = scmp.ne.s32.totalorder %s134, %s137
      %p143 = scmp.eq.s32.totalorder %s19, 0
      %p144 = por %p142, %p143
      %p145 = scmp.ne.s32.totalorder %s134, %s137
      %p146 = scmp.eq.s32.totalorder %s24, 1
      %p147 = por %p145, %p146
      %p148 = scmp.ne.s32.totalorder %s137, %s138
      %p149 = scmp.eq.s32.totalorder %s24, 0
      %p150 = por %p148, %p149
      %p151 = scmp.ne.s32.totalorder %s137, %s138
      %p152 = scmp.eq.s32.totalorder %s25, 1
      %p153 = por %p151, %p152
      %p155 = scmp.ne.s32.totalorder %s138, %s154
      %p156 = scmp.eq.s32.totalorder %s25, 0
      %p157 = por %p155, %p156
      %s158 = ssub.s32 %s26, %s38
      %s159 = ssub.s32 %s27, %s34
      %s160 = sor.u32 %s158, %s159
      %p161 = scmp.eq.s32.totalorder %s160, 0
      %s163 = sadd.s32 %s162, 1
      %s164 = scalar_select %p161, %s162, %s163
      %p167 = pneg %p161
      %p168 = scmp.eq.s32.totalorder %s19, 1
      %p169 = por %p167, %p168
      %p170 = scmp.ne.s32.totalorder %s162, %s165
      %p171 = scmp.eq.s32.totalorder %s19, 0
      %p172 = por %p170, %p171
      %p173 = scmp.ne.s32.totalorder %s162, %s165
      %p174 = scmp.eq.s32.totalorder %s24, 1
      %p175 = por %p173, %p174
      %p176 = scmp.ne.s32.totalorder %s165, %s166
      %p177 = scmp.eq.s32.totalorder %s24, 0
      %p178 = por %p176, %p177
      %p179 = scmp.ne.s32.totalorder %s165, %s166
      %p180 = scmp.eq.s32.totalorder %s25, 1
      %p181 = por %p179, %p180
      %p183 = scmp.ne.s32.totalorder %s166, %s182
      %p184 = scmp.eq.s32.totalorder %s25, 0
      %p185 = por %p183, %p184
      %s186 = ssub.s32 %s26, %s38
      %s187 = ssub.s32 %s27, %s34
      %s188 = sor.u32 %s186, %s187
      %p189 = scmp.eq.s32.totalorder %s188, 0
      %s191 = sadd.s32 %s190, 1
      %s192 = scalar_select %p189, %s190, %s191
      %p195 = pneg %p189
      %p196 = scmp.eq.s32.totalorder %s19, 1
      %p197 = por %p195, %p196
      %p198 = scmp.ne.s32.totalorder %s190, %s193
      %p199 = scmp.eq.s32.totalorder %s19, 0
      %p200 = por %p198, %p199
      %p201 = scmp.ne.s32.totalorder %s190, %s193
      %p202 = scmp.eq.s32.totalorder %s24, 1
      %p203 = por %p201, %p202
      %p204 = scmp.ne.s32.totalorder %s193, %s194
      %p205 = scmp.eq.s32.totalorder %s24, 0
      %p206 = por %p204, %p205
      %p207 = scmp.ne.s32.totalorder %s193, %s194
      %p208 = scmp.eq.s32.totalorder %s25, 1
      %p209 = por %p207, %p208
      %p211 = scmp.ne.s32.totalorder %s194, %s210
      %p212 = scmp.eq.s32.totalorder %s25, 0
      %p213 = por %p211, %p212
      %p214 = scmp.le.s32.totalorder 1, %s19
      %p215 = scmp.lt.s32.totalorder %s19, 3
      %p216 = pnand %p214, %p215
      %p217 = pneg %p216
      // Predicated region
      $region9: #{tpu_custom_call.1} parent=5 // pred_check
        _
      $region10: #{tpu_custom_call.1} parent=5 // pred_check_branch
        %219 = sbr.rel (%p216) target = $region12
      $region11: #{tpu_custom_call.1} parent=5 // pred_region
        %s220 = ssub.s32 %s19, 1
        // Predicated region
        $region13: #{tpu_custom_call.1} parent=11 // pred_check
          %p221 = pneg %p80
        $region14: #{tpu_custom_call.1} parent=11 // pred_check_branch
          %223 = sbr.rel (%p221) target = $region16
        $region15: #{tpu_custom_call.1} parent=11 // pred_region
          _
        $region16: #{tpu_custom_call.1} parent=11 // pred_fallthru
          _
        // Predicated region
        $region17: #{tpu_custom_call.1} parent=11 // pred_check
          %p224 = pneg %p101
        $region18: #{tpu_custom_call.1} parent=11 // pred_check_branch
          %226 = sbr.rel (%p224) target = $region20
        $region19: #{tpu_custom_call.1} parent=11 // pred_region
          _
        $region20: #{tpu_custom_call.1} parent=11 // pred_fallthru
          _
        // Predicated region
        $region21: #{tpu_custom_call.1} parent=11 // pred_check
          %p227 = pneg %p122
        $region22: #{tpu_custom_call.1} parent=11 // pred_check_branch
          %229 = sbr.rel (%p227) target = $region24
        $region23: #{tpu_custom_call.1} parent=11 // pred_region
          _
        $region24: #{tpu_custom_call.1} parent=11 // pred_fallthru
          _
      $region12: #{tpu_custom_call.1} parent=5 // pred_fallthru
        _
      %p230 = scmp.lt.s32.totalorder %s19, 2
      // Predicated region
      $region25: #{tpu_custom_call.1} parent=5 // pred_check
        %p231 = pneg %p230
      $region26: #{tpu_custom_call.1} parent=5 // pred_check_branch
        %233 = sbr.rel (%p231) target = $region28
      $region27: #{tpu_custom_call.1} parent=5 // pred_region
        // Predicated region
        $region29: #{tpu_custom_call.1} parent=27 // pred_check
          %p234 = pneg %p53
        $region30: #{tpu_custom_call.1} parent=27 // pred_check_branch
          %236 = sbr.rel (%p234) target = $region32
        $region31: #{tpu_custom_call.1} parent=27 // pred_region
          %p237 = scmp.lt.s32.totalorder %s26, 1
          %s238 = scalar_select %p237, %s26, 1
          %p239 = scmp.lt.s32.totalorder %s27, 0
          %s240 = scalar_select %p239, %s27, 0
          %s241 = sadd.s32 %s240, %s238
          %s242 = smul.addr %s241, 4
          %s243 = scalar_lea.vmem %s0, %s242
        $region32: #{tpu_custom_call.1} parent=27 // pred_fallthru
          _
      $region28: #{tpu_custom_call.1} parent=5 // pred_fallthru
        _
      %p244 = scmp.le.s32.totalorder 1, %s19
      %p245 = scmp.lt.s32.totalorder %s19, 3
      %p246 = pnand %p244, %p245
      %p247 = pneg %p246
      // Predicated region
      $region33: #{tpu_custom_call.1} parent=5 // pred_check
        _
      $region34: #{tpu_custom_call.1} parent=5 // pred_check_branch
        %249 = sbr.rel (%p246) target = $region36
      $region35: #{tpu_custom_call.1} parent=5 // pred_region
        %s250 = ssub.s32 %s19, 1
        %p251 = scmp.lt.s32.totalorder %s28, 1
        %s252 = scalar_select %p251, %s28, 1
        %p253 = scmp.lt.s32.totalorder %s29, 0
        %s254 = scalar_select %p253, %s29, 0
        %s255 = sadd.s32 %s254, %s252
        %s256 = smul.addr %s255, 4
        %s257 = scalar_lea.vmem %s0, %s256
        %p258 = pneg %p59
        %p259 = pneg %p56
        %p260 = pneg %p80
        %p261 = pneg %p77
        %p262 = pneg %p101
        %p263 = pneg %p98
        %p264 = pneg %p122
        %p265 = pneg %p119
        %p266 = pneg %p150
        %p267 = pneg %p147
        %s268 = sand.u32 %s137, 1
        %s269 = scalar_lea.sflag [#allocation3], %s268
        %s270 = sand.u32 %s137, 1
        %s271 = smul.addr %s270, 16
        %s272 = scalar_lea.vmem [#allocation2], %s271
        %p273 = pneg %p178
        %p274 = pneg %p175
        %p275 = scmp.lt.s32.totalorder %s28, 1
        %s276 = scalar_select %p275, %s28, 1
        %p277 = scmp.lt.s32.totalorder %s29, 0
        %s278 = scalar_select %p277, %s29, 0
        %s279 = smul.addr %s276, 8
        %s280 = sadd.s32 %s278, %s279
        %s281 = smul.addr %s280, 4
        %s282 = scalar_lea.vmem %s5, %s281
        %p283 = pneg %p206
        %p284 = pneg %p203
        %s285 = sand.u32 %s193, 1
        %s286 = scalar_lea.sflag [#allocation5], %s285
        %s287 = sand.u32 %s193, 1
        %s288 = smul.addr %s287, 16
        %s289 = scalar_lea.vmem [#allocation4], %s288
        %p290 = scmp.lt.s32.totalorder %s28, 1
        %s291 = scalar_select %p290, %s28, 1
        %p292 = scmp.lt.s32.totalorder %s29, 0
        %s293 = scalar_select %p292, %s29, 0
        %s294 = sadd.s32 %s293, %s291
        %s295 = smul.addr %s294, 4
        %s296 = scalar_lea.vmem %s0, %s295
        %p297 = scmp.lt.s32.totalorder %s28, 1
        %s298 = scalar_select %p297, %s28, 1
        %p299 = scmp.lt.s32.totalorder %s29, 0
        %s300 = scalar_select %p299, %s29, 0
        %s301 = smul.addr %s298, 8
        %s302 = sadd.s32 %s300, %s301
        %s303 = smul.addr %s302, 4
        %s304 = scalar_lea.vmem %s5, %s303
        %v306 = vld [vmem:[%s296] sm:$0xf]
        %v307 = vld [vmem:[%s1] sm:$0xf]
        %v308 = vld [vmem:[%s1 + $0x4] sm:$0xf]
        %v309 = vld [vmem:[%s1 + $0x8] sm:$0xf]
        %v310 = vld [vmem:[%s1 + $0xc] sm:$0xf]
        %v315 = vunpack.c.l.b16 %v307
        %v316 = vunpack.c.l.b16 %v308
        %v317 = vunpack.c.l.b16 %v309
        %v318 = vunpack.c.l.b16 %v310
        %v319 = vpack.c.b16 %v316, %v315
        %v320 = vpack.c.b16 %v318, %v317
        %vm323 = vcmask 261120
        %v325 = vsel %vm323, %v306, 0
        %327 = vmatpush.bf16.msra.mxu0 0
        %328 = vmatpush.bf16.msra.mxu0 0
        %329 = vmatpush.bf16.msra.mxu0 0
        %330 = vmatpush.bf16.msra.mxu0 0
        %331 = vmatpush.bf16.msra.mxu0 0
        %332 = vmatpush.bf16.msra.mxu0 0
        %333 = vmatpush.bf16.msra.mxu0 %v320
        %334 = vmatpush.bf16.msra.mxu0 %v319
        %335 = vmatmul.bf16.gmra.mxu0 %v325
        %v336 = vpop.f32.mrf.mxu0
        %v337 = vadd.f32 0.0, %v336
        %v338 = vpop.f32.mrf.mxu0
        %339 = vdwg.mxu0
        %v340 = vpack.c.bf16 %v337, %v337
        %vm341 = vcmask 125952
        %342 = vst.msk [vmem:[%s272] sm:$0xf] %vm341, %v340
        %v343 = vld [vmem:[%s2] sm:$0xf]
        %v344 = vld [vmem:[%s2 + $0x4] sm:$0xf]
        %v347 = vunpack.c.l.b16 %v343
        %v348 = vunpack.c.l.b16 %v344
        %v349 = vpack.c.b16 %v348, %v347
        %v351 = vsel %vm323, %v349, 0
        %353 = vmatpush.bf16.xpose.msra.mxu0 0
        %354 = vmatpush.bf16.xpose.msra.mxu0 0
        %355 = vmatpush.bf16.xpose.msra.mxu0 0
        %356 = vmatpush.bf16.xpose.msra.mxu0 0
        %357 = vmatpush.bf16.xpose.msra.mxu0 0
        %358 = vmatpush.bf16.xpose.msra.mxu0 0
        %359 = vmatpush.bf16.xpose.msra.mxu0 0
        %360 = vmatpush.bf16.xpose.msra.mxu0 %v325
        %361 = vmatmul.bf16.gmra.mxu0 %v351
        %v362 = vpop.f32.mrf.mxu0
        %v363 = vadd.f32 0.0, %v362
        %v364 = vpop.f32.mrf.mxu0
        %v365 = vadd.f32 0.0, %v364
        %366 = vdwg.mxu0
        %v367 = vpack.c.bf16 %v363, %v363
        %v368 = vpack.c.bf16 %v365, %v365
        %vm369 = vcmask 60416
        %370 = vst.msk [vmem:[%s304] sm:$0xf] %vm369, %v367
        %371 = vst.msk [vmem:[%s304 + $0x4] sm:$0xf] %vm369, %v368
        %v372 = vld [vmem:[%s3] sm:$0xf]
        %v373 = vld [vmem:[%s3 + $0x4] sm:$0xf]
        %v374 = vld [vmem:[%s3 + $0x8] sm:$0xf]
        %v375 = vld [vmem:[%s3 + $0xc] sm:$0xf]
        %v380 = vunpack.c.l.b16 %v372
        %v381 = vunpack.c.l.b16 %v373
        %v382 = vunpack.c.l.b16 %v374
        %v383 = vunpack.c.l.b16 %v375
        %v384 = vpack.c.b16 %v381, %v380
        %v385 = vpack.c.b16 %v383, %v382
        %388 = vmatpush.bf16.msra.mxu0 0
        %389 = vmatpush.bf16.msra.mxu0 0
        %390 = vmatpush.bf16.msra.mxu0 0
        %391 = vmatpush.bf16.msra.mxu0 0
        %392 = vmatpush.bf16.msra.mxu0 0
        %393 = vmatpush.bf16.msra.mxu0 0
        %394 = vmatpush.bf16.msra.mxu0 %v385
        %395 = vmatpush.bf16.msra.mxu0 %v384
        %396 = vmatmul.bf16.gmra.mxu0 %v325
        %v397 = vpop.f32.mrf.mxu0
        %v398 = vadd.f32 0.0, %v397
        %v399 = vpop.f32.mrf.mxu0
        %400 = vdwg.mxu0
        %v401 = vpack.c.bf16 %v398, %v398
        %402 = vst.msk [vmem:[%s289] sm:$0xf] %vm341, %v401
        %s403 = scalar_lea.vmem %s1, 16
        %v404 = vld [vmem:[%s403] sm:$0xf]
        %v405 = vld [vmem:[%s403 + $0x4] sm:$0xf]
        %v406 = vld [vmem:[%s403 + $0x8] sm:$0xf]
        %v407 = vld [vmem:[%s403 + $0xc] sm:$0xf]
        %v412 = vunpack.c.l.b16 %v404
        %v413 = vunpack.c.l.b16 %v405
        %v414 = vunpack.c.l.b16 %v406
        %v415 = vunpack.c.l.b16 %v407
        %v416 = vpack.c.b16 %v413, %v412
        %v417 = vpack.c.b16 %v415, %v414
        %420 = vmatpush.bf16.msra.mxu0 0
        %421 = vmatpush.bf16.msra.mxu0 0
        %422 = vmatpush.bf16.msra.mxu0 0
        %423 = vmatpush.bf16.msra.mxu0 0
        %424 = vmatpush.bf16.msra.mxu0 0
        %425 = vmatpush.bf16.msra.mxu0 0
        %426 = vmatpush.bf16.msra.mxu0 %v417
        %427 = vmatpush.bf16.msra.mxu0 %v416
        %428 = vmatmul.bf16.gmra.mxu0 %v325
        %v429 = vpop.f32.mrf.mxu0
        %v430 = vadd.f32 0.0, %v429
        %v431 = vpop.f32.mrf.mxu0
        %432 = vdwg.mxu0
        %v433 = vpack.c.bf16 %v430, %v430
        %s434 = scalar_lea.vmem %s272, 4 [#allocation2]
        %435 = vst.msk [vmem:[%s434] sm:$0xf] %vm341, %v433
        %s436 = scalar_lea.vmem %s2, 8
        %v437 = vld [vmem:[%s436] sm:$0xf]
        %v438 = vld [vmem:[%s436 + $0x4] sm:$0xf]
        %v441 = vunpack.c.l.b16 %v437
        %v442 = vunpack.c.l.b16 %v438
        %v443 = vpack.c.b16 %v442, %v441
        %v445 = vsel %vm323, %v443, 0
        %447 = vmatpush.bf16.xpose.msra.mxu0 0
        %448 = vmatpush.bf16.xpose.msra.mxu0 0
        %449 = vmatpush.bf16.xpose.msra.mxu0 0
        %450 = vmatpush.bf16.xpose.msra.mxu0 0
        %451 = vmatpush.bf16.xpose.msra.mxu0 0
        %452 = vmatpush.bf16.xpose.msra.mxu0 0
        %453 = vmatpush.bf16.xpose.msra.mxu0 0
        %454 = vmatpush.bf16.xpose.msra.mxu0 %v325
        %455 = vmatmul.bf16.gmra.mxu0 %v445
        %v456 = vpop.f32.mrf.mxu0
        %v457 = vadd.f32 0.0, %v456
        %v458 = vpop.f32.mrf.mxu0
        %v459 = vadd.f32 0.0, %v458
        %460 = vdwg.mxu0
        %v461 = vpack.c.bf16 %v457, %v457
        %v462 = vpack.c.bf16 %v459, %v459
        %s463 = scalar_lea.vmem %s304, 8
        %464 = vst.msk [vmem:[%s463] sm:$0xf] %vm369, %v461
        %465 = vst.msk [vmem:[%s463 + $0x4] sm:$0xf] %vm369, %v462
        %s466 = scalar_lea.vmem %s3, 16
        %v467 = vld [vmem:[%s466] sm:$0xf]
        %v468 = vld [vmem:[%s466 + $0x4] sm:$0xf]
        %v469 = vld [vmem:[%s466 + $0x8] sm:$0xf]
        %v470 = vld [vmem:[%s466 + $0xc] sm:$0xf]
        %v475 = vunpack.c.l.b16 %v467
        %v476 = vunpack.c.l.b16 %v468
        %v477 = vunpack.c.l.b16 %v469
        %v478 = vunpack.c.l.b16 %v470
        %v479 = vpack.c.b16 %v476, %v475
        %v480 = vpack.c.b16 %v478, %v477
        %483 = vmatpush.bf16.msra.mxu0 0
        %484 = vmatpush.bf16.msra.mxu0 0
        %485 = vmatpush.bf16.msra.mxu0 0
        %486 = vmatpush.bf16.msra.mxu0 0
        %487 = vmatpush.bf16.msra.mxu0 0
        %488 = vmatpush.bf16.msra.mxu0 0
        %489 = vmatpush.bf16.msra.mxu0 %v480
        %490 = vmatpush.bf16.msra.mxu0 %v479
        %491 = vmatmul.bf16.gmra.mxu0 %v325
        %v492 = vpop.f32.mrf.mxu0
        %v493 = vadd.f32 0.0, %v492
        %v494 = vpop.f32.mrf.mxu0
        %495 = vdwg.mxu0
        %v496 = vpack.c.bf16 %v493, %v493
        %s497 = scalar_lea.vmem %s289, 4 [#allocation4]
        %498 = vst.msk [vmem:[%s497] sm:$0xf] %vm341, %v496
        %s499 = scalar_lea.vmem %s1, 32
        %v500 = vld [vmem:[%s499] sm:$0xf]
        %v501 = vld [vmem:[%s499 + $0x4] sm:$0xf]
        %v502 = vld [vmem:[%s499 + $0x8] sm:$0xf]
        %v503 = vld [vmem:[%s499 + $0xc] sm:$0xf]
        %v508 = vunpack.c.l.b16 %v500
        %v509 = vunpack.c.l.b16 %v501
        %v510 = vunpack.c.l.b16 %v502
        %v511 = vunpack.c.l.b16 %v503
        %v512 = vpack.c.b16 %v509, %v508
        %v513 = vpack.c.b16 %v511, %v510
        %516 = vmatpush.bf16.msra.mxu0 0
        %517 = vmatpush.bf16.msra.mxu0 0
        %518 = vmatpush.bf16.msra.mxu0 0
        %519 = vmatpush.bf16.msra.mxu0 0
        %520 = vmatpush.bf16.msra.mxu0 0
        %521 = vmatpush.bf16.msra.mxu0 0
        %522 = vmatpush.bf16.msra.mxu0 %v513
        %523 = vmatpush.bf16.msra.mxu0 %v512
        %524 = vmatmul.bf16.gmra.mxu0 %v325
        %v525 = vpop.f32.mrf.mxu0
        %v526 = vadd.f32 0.0, %v525
        %v527 = vpop.f32.mrf.mxu0
        %528 = vdwg.mxu0
        %v529 = vpack.c.bf16 %v526, %v526
        %s530 = scalar_lea.vmem %s272, 8 [#allocation2]
        %531 = vst.msk [vmem:[%s530] sm:$0xf] %vm341, %v529
        %s532 = scalar_lea.vmem %s2, 16
        %v533 = vld [vmem:[%s532] sm:$0xf]
        %v534 = vld [vmem:[%s532 + $0x4] sm:$0xf]
        %v537 = vunpack.c.l.b16 %v533
        %v538 = vunpack.c.l.b16 %v534
        %v539 = vpack.c.b16 %v538, %v537
        %v541 = vsel %vm323, %v539, 0
        %543 = vmatpush.bf16.xpose.msra.mxu0 0
        %544 = vmatpush.bf16.xpose.msra.mxu0 0
        %545 = vmatpush.bf16.xpose.msra.mxu0 0
        %546 = vmatpush.bf16.xpose.msra.mxu0 0
        %547 = vmatpush.bf16.xpose.msra.mxu0 0
        %548 = vmatpush.bf16.xpose.msra.mxu0 0
        %549 = vmatpush.bf16.xpose.msra.mxu0 0
        %550 = vmatpush.bf16.xpose.msra.mxu0 %v325
        %551 = vmatmul.bf16.gmra.mxu0 %v541
        %v552 = vpop.f32.mrf.mxu0
        %v553 = vadd.f32 0.0, %v552
        %v554 = vpop.f32.mrf.mxu0
        %v555 = vadd.f32 0.0, %v554
        %556 = vdwg.mxu0
        %v557 = vpack.c.bf16 %v553, %v553
        %v558 = vpack.c.bf16 %v555, %v555
        %s559 = scalar_lea.vmem %s304, 16
        %560 = vst.msk [vmem:[%s559] sm:$0xf] %vm369, %v557
        %561 = vst.msk [vmem:[%s559 + $0x4] sm:$0xf] %vm369, %v558
        %s562 = scalar_lea.vmem %s3, 32
        %v563 = vld [vmem:[%s562] sm:$0xf]
        %v564 = vld [vmem:[%s562 + $0x4] sm:$0xf]
        %v565 = vld [vmem:[%s562 + $0x8] sm:$0xf]
        %v566 = vld [vmem:[%s562 + $0xc] sm:$0xf]
        %v571 = vunpack.c.l.b16 %v563
        %v572 = vunpack.c.l.b16 %v564
        %v573 = vunpack.c.l.b16 %v565
        %v574 = vunpack.c.l.b16 %v566
        %v575 = vpack.c.b16 %v572, %v571
        %v576 = vpack.c.b16 %v574, %v573
        %579 = vmatpush.bf16.msra.mxu0 0
        %580 = vmatpush.bf16.msra.mxu0 0
        %581 = vmatpush.bf16.msra.mxu0 0
        %582 = vmatpush.bf16.msra.mxu0 0
        %583 = vmatpush.bf16.msra.mxu0 0
        %584 = vmatpush.bf16.msra.mxu0 0
        %585 = vmatpush.bf16.msra.mxu0 %v576
        %586 = vmatpush.bf16.msra.mxu0 %v575
        %587 = vmatmul.bf16.gmra.mxu0 %v325
        %v588 = vpop.f32.mrf.mxu0
        %v589 = vadd.f32 0.0, %v588
        %v590 = vpop.f32.mrf.mxu0
        %591 = vdwg.mxu0
        %v592 = vpack.c.bf16 %v589, %v589
        %s593 = scalar_lea.vmem %s289, 8 [#allocation4]
        %594 = vst.msk [vmem:[%s593] sm:$0xf] %vm341, %v592
        %s595 = scalar_lea.vmem %s1, 48
        %v596 = vld [vmem:[%s595] sm:$0xf]
        %v597 = vld [vmem:[%s595 + $0x4] sm:$0xf]
        %v598 = vld [vmem:[%s595 + $0x8] sm:$0xf]
        %v599 = vld [vmem:[%s595 + $0xc] sm:$0xf]
        %v604 = vunpack.c.l.b16 %v596
        %v605 = vunpack.c.l.b16 %v597
        %v606 = vunpack.c.l.b16 %v598
        %v607 = vunpack.c.l.b16 %v599
        %v608 = vpack.c.b16 %v605, %v604
        %v609 = vpack.c.b16 %v607, %v606
        %612 = vmatpush.bf16.msra.mxu0 0
        %613 = vmatpush.bf16.msra.mxu0 0
        %614 = vmatpush.bf16.msra.mxu0 0
        %615 = vmatpush.bf16.msra.mxu0 0
        %616 = vmatpush.bf16.msra.mxu0 0
        %617 = vmatpush.bf16.msra.mxu0 0
        %618 = vmatpush.bf16.msra.mxu0 %v609
        %619 = vmatpush.bf16.msra.mxu0 %v608
        %620 = vmatmul.bf16.gmra.mxu0 %v325
        %v621 = vpop.f32.mrf.mxu0
        %v622 = vadd.f32 0.0, %v621
        %v623 = vpop.f32.mrf.mxu0
        %624 = vdwg.mxu0
        %v625 = vpack.c.bf16 %v622, %v622
        %s626 = scalar_lea.vmem %s272, 12 [#allocation2]
        %627 = vst.msk [vmem:[%s626] sm:$0xf] %vm341, %v625
        %s628 = scalar_lea.vmem %s2, 24
        %v629 = vld [vmem:[%s628] sm:$0xf]
        %v630 = vld [vmem:[%s628 + $0x4] sm:$0xf]
        %v633 = vunpack.c.l.b16 %v629
        %v634 = vunpack.c.l.b16 %v630
        %v635 = vpack.c.b16 %v634, %v633
        %v637 = vsel %vm323, %v635, 0
        %639 = vmatpush.bf16.xpose.msra.mxu0 0
        %640 = vmatpush.bf16.xpose.msra.mxu0 0
        %641 = vmatpush.bf16.xpose.msra.mxu0 0
        %642 = vmatpush.bf16.xpose.msra.mxu0 0
        %643 = vmatpush.bf16.xpose.msra.mxu0 0
        %644 = vmatpush.bf16.xpose.msra.mxu0 0
        %645 = vmatpush.bf16.xpose.msra.mxu0 0
        %646 = vmatpush.bf16.xpose.msra.mxu0 %v325
        %647 = vmatmul.bf16.gmra.mxu0 %v637
        %v648 = vpop.f32.mrf.mxu0
        %v649 = vadd.f32 0.0, %v648
        %v650 = vpop.f32.mrf.mxu0
        %v651 = vadd.f32 0.0, %v650
        %652 = vdwg.mxu0
        %v653 = vpack.c.bf16 %v649, %v649
        %v654 = vpack.c.bf16 %v651, %v651
        %s655 = scalar_lea.vmem %s304, 24
        %656 = vst.msk [vmem:[%s655] sm:$0xf] %vm369, %v653
        %657 = vst.msk [vmem:[%s655 + $0x4] sm:$0xf] %vm369, %v654
        %s658 = scalar_lea.vmem %s3, 48
        %v659 = vld [vmem:[%s658] sm:$0xf]
        %v660 = vld [vmem:[%s658 + $0x4] sm:$0xf]
        %v661 = vld [vmem:[%s658 + $0x8] sm:$0xf]
        %v662 = vld [vmem:[%s658 + $0xc] sm:$0xf]
        %v667 = vunpack.c.l.b16 %v659
        %v668 = vunpack.c.l.b16 %v660
        %v669 = vunpack.c.l.b16 %v661
        %v670 = vunpack.c.l.b16 %v662
        %v671 = vpack.c.b16 %v668, %v667
        %v672 = vpack.c.b16 %v670, %v669
        %675 = vmatpush.bf16.msra.mxu0 0
        %676 = vmatpush.bf16.msra.mxu0 0
        %677 = vmatpush.bf16.msra.mxu0 0
        %678 = vmatpush.bf16.msra.mxu0 0
        %679 = vmatpush.bf16.msra.mxu0 0
        %680 = vmatpush.bf16.msra.mxu0 0
        %681 = vmatpush.bf16.msra.mxu0 %v672
        %682 = vmatpush.bf16.msra.mxu0 %v671
        %683 = vmatmul.bf16.gmra.mxu0 %v325
        %v684 = vpop.f32.mrf.mxu0
        %v685 = vadd.f32 0.0, %v684
        %v686 = vpop.f32.mrf.mxu0
        %687 = vdwg.mxu0
        %v688 = vpack.c.bf16 %v685, %v685
        %s689 = scalar_lea.vmem %s289, 12 [#allocation4]
        %690 = vst.msk [vmem:[%s689] sm:$0xf] %vm341, %v688
        %s691 = sand.u32 %s137, 1
        %s692 = scalar_lea.sflag [#allocation3], %s691
        %s693 = sand.u32 %s137, 1
        %s694 = smul.addr %s693, 16
        %s695 = scalar_lea.vmem [#allocation2], %s694
        %p696 = scmp.lt.s32.totalorder %s28, 1
        %s697 = scalar_select %p696, %s28, 1
        %p698 = scmp.lt.s32.totalorder %s29, 0
        %s699 = scalar_select %p698, %s29, 0
        %s700 = smul.addr %s697, 8
        %s701 = sadd.s32 %s699, %s700
        %s702 = smul.addr %s701, 4
        %s703 = scalar_lea.vmem %s5, %s702
        %s704 = sand.u32 %s193, 1
        %s705 = scalar_lea.sflag [#allocation5], %s704
        %s706 = sand.u32 %s193, 1
        %s707 = smul.addr %s706, 16
        %s708 = scalar_lea.vmem [#allocation4], %s707
        // Predicated region
        $region37: #{tpu_custom_call.1} parent=35 // pred_check
          %p709 = pneg %p147
        $region38: #{tpu_custom_call.1} parent=35 // pred_check_branch
          %711 = sbr.rel (%p709) target = $region40
        $region39: #{tpu_custom_call.1} parent=35 // pred_region
          %713 = vsyncadd %s692, 0
          %s714 = smul.addr %s28, 4
          %s715 = sadd.s32 %s29, %s714
          %s716 = smul.addr %s715, 4
          %s717 = scalar_lea.hbm %s4, %s716
          %s718 = sshll.u32 %s695, 4
          %s719 = int_to_ptr.vmem [resolvable:$true] %s718
          %s720 = sshll.u32 %s717, 4
          %s721 = int_to_ptr.hbm [resolvable:$true] %s720
          %726 = dma.vmem_to_hbm [thread:$0]  %s719, 256, %s721, %s692, 64, 64, 4
        $region40: #{tpu_custom_call.1} parent=35 // pred_fallthru
          _
        // Predicated region
        $region41: #{tpu_custom_call.1} parent=35 // pred_check
          %p727 = pneg %p175
        $region42: #{tpu_custom_call.1} parent=35 // pred_check_branch
          %729 = sbr.rel (%p727) target = $region44
        $region43: #{tpu_custom_call.1} parent=35 // pred_region
          _
        $region44: #{tpu_custom_call.1} parent=35 // pred_fallthru
          _
        // Predicated region
        $region45: #{tpu_custom_call.1} parent=35 // pred_check
          %p730 = pneg %p203
        $region46: #{tpu_custom_call.1} parent=35 // pred_check_branch
          %732 = sbr.rel (%p730) target = $region48
        $region47: #{tpu_custom_call.1} parent=35 // pred_region
          %734 = vsyncadd %s705, 0
          %s735 = smul.addr %s28, 4
          %s736 = sadd.s32 %s29, %s735
          %s737 = smul.addr %s736, 4
          %s738 = scalar_lea.hbm %s6, %s737
          %s739 = sshll.u32 %s708, 4
          %s740 = int_to_ptr.vmem [resolvable:$true] %s739
          %s741 = sshll.u32 %s738, 4
          %s742 = int_to_ptr.hbm [resolvable:$true] %s741
          %747 = dma.vmem_to_hbm [thread:$0]  %s740, 256, %s742, %s705, 64, 64, 4
        $region48: #{tpu_custom_call.1} parent=35 // pred_fallthru
          _
      $region36: #{tpu_custom_call.1} parent=5 // pred_fallthru
        _
      %p748 = scmp.le.s32.totalorder 2, %s19
      // Predicated region
      $region49: #{tpu_custom_call.1} parent=5 // pred_check
        %p749 = pneg %p748
      $region50: #{tpu_custom_call.1} parent=5 // pred_check_branch
        %751 = sbr.rel (%p749) target = $region52
      $region51: #{tpu_custom_call.1} parent=5 // pred_region
        %s752 = ssub.s32 %s19, 2
        // Predicated region
        $region53: #{tpu_custom_call.1} parent=51 // pred_check
          %p753 = pneg %p153
        $region54: #{tpu_custom_call.1} parent=51 // pred_check_branch
          %755 = sbr.rel (%p753) target = $region56
        $region55: #{tpu_custom_call.1} parent=51 // pred_region
          %s756 = sand.u32 %s138, 1
          %s757 = scalar_lea.sflag [#allocation3], %s756
          %s758 = sand.u32 %s138, 1
          %s759 = smul.addr %s758, 16
          %s760 = scalar_lea.vmem [#allocation2], %s759
          %762 = dma.done %s757, 256
        $region56: #{tpu_custom_call.1} parent=51 // pred_fallthru
          _
        // Predicated region
        $region57: #{tpu_custom_call.1} parent=51 // pred_check
          %p763 = pneg %p181
        $region58: #{tpu_custom_call.1} parent=51 // pred_check_branch
          %765 = sbr.rel (%p763) target = $region60
        $region59: #{tpu_custom_call.1} parent=51 // pred_region
          %p766 = scmp.lt.s32.totalorder %s30, 1
          %s767 = scalar_select %p766, %s30, 1
          %p768 = scmp.lt.s32.totalorder %s31, 0
          %s769 = scalar_select %p768, %s31, 0
          %s770 = smul.addr %s767, 8
          %s771 = sadd.s32 %s769, %s770
          %s772 = smul.addr %s771, 4
          %s773 = scalar_lea.vmem %s5, %s772
        $region60: #{tpu_custom_call.1} parent=51 // pred_fallthru
          _
        // Predicated region
        $region61: #{tpu_custom_call.1} parent=51 // pred_check
          %p774 = pneg %p209
        $region62: #{tpu_custom_call.1} parent=51 // pred_check_branch
          %776 = sbr.rel (%p774) target = $region64
        $region63: #{tpu_custom_call.1} parent=51 // pred_region
          %s777 = sand.u32 %s194, 1
          %s778 = scalar_lea.sflag [#allocation5], %s777
          %s779 = sand.u32 %s194, 1
          %s780 = smul.addr %s779, 16
          %s781 = scalar_lea.vmem [#allocation4], %s780
          %783 = dma.done %s778, 256
        $region64: #{tpu_custom_call.1} parent=51 // pred_fallthru
          _
      $region52: #{tpu_custom_call.1} parent=5 // pred_fallthru
        _
    $region6: #{tpu_custom_call.1} parent=1 // loop_footer
      %s23 = sadd.s32 1, %s19
    $region7: #{tpu_custom_call.1} parent=1 // loop_footer_branch
      %18 = sbr.rel target = $region3
    $region8: #{tpu_custom_call.1} parent=1 // loop_exit
      _
    %784 = vsyncpa [#allocation3], 1
    %s785 = scalar_lea.sflag [#allocation3], 1
    %786 = vsyncpa %s785, 1
    %787 = vsyncpa [#allocation5], 1
    %s788 = scalar_lea.sflag [#allocation5], 1
    %789 = vsyncpa %s788, 1

</llo_original>
